<compile_context>
chip_gen: v5e
topology: v5e:2x2
jax: 0.10.0
libtpu: 0.0.40
codegen_flags: <defaults>
</compile_context>

<pallas_src>
import jax
import jax.numpy as jnp
from jax.experimental import pallas as pl
from jax.experimental.pallas import tpu as pltpu

SPECIES_DICT = {'H': 1, 'C': 6, 'N': 7, 'O': 8}

N_ATOMS = 8      # atoms in the example molecule
EMB_DIM = 32     # species embedding width
N_RBF = 16       # radial basis functions
GAMMA = 4.0      # RBF width
MAX_Z = 9        # embedding table rows (atomic numbers 0..8)
LANE = 128       # lane-dense output width


def _trip_energy_kernel(mu_ref, w_ref, pos_ref, post_ref, emb_ref, e_ref, f_ref):
    """One molecule per grid step.

    mu_ref, w_ref : (K,)      f32  SMEM  (RBF centers / readout weights)
    pos_ref       : (N, 3)    f32  VMEM  (positions, row layout)
    post_ref      : (3, N)    f32  VMEM  (positions, transposed layout)
    emb_ref       : (N, D)    f32  VMEM  (per-atom species embeddings)
    e_ref         : (1, 1)    f32  SMEM  (scalar energy out)
    f_ref         : (N, 128)  f32  VMEM  (lane-dense forces out; lanes 0..2)
    """
    n = pos_ref.shape[0]

    # ---- all-pairs geometry (cutoff = inf => fully connected graph) ----
    # Per-component 2-D math: plain VPU adds/muls on (8,128)-padded vregs.
    # Dual-layout inputs avoid any in-kernel transpose.
    px_c = pos_ref[:, 0:1]          # (N, 1)
    py_c = pos_ref[:, 1:2]
    pz_c = pos_ref[:, 2:3]
    px_r = post_ref[0:1, :]         # (1, N)
    py_r = post_ref[1:2, :]
    pz_r = post_ref[2:3, :]

    dx = px_c - px_r                # (N, N)
    dy = py_c - py_r
    dz = pz_c - pz_r
    d2 = dx * dx + dy * dy + dz * dz
    d = jnp.sqrt(d2 + 1e-12)        # safe on the diagonal

    # off-diagonal mask (no self-interaction)
    row = jax.lax.broadcasted_iota(jnp.int32, (n, n), 0)
    col = jax.lax.broadcasted_iota(jnp.int32, (n, n), 1)
    mask = (row != col).astype(jnp.float32)

    # ---- species-pair coupling: transpose-free MXU matmul ----
    emb = emb_ref[...]              # (N, D)
    s = jax.lax.dot_general(
        emb, emb, (((1,), (1,)), ((), ())),
        preferred_element_type=jnp.float32)            # (N, N)

    # ---- Gaussian RBF readout, f(d) and f'(d), no (N,N,K) intermediate ----
    # Unrolled K loop over (N,N) vregs; mu_k / w_k come from the scalar path.
    # TODO(synk): for large N, tile over pair blocks and use the
    # (N^2, K) @ (K, 2) MXU formulation instead of this K-loop.
    f_d = jnp.zeros((n, n), jnp.float32)
    fp_d = jnp.zeros((n, n), jnp.float32)
    for k in range(N_RBF):
        mu_k = mu_ref[k]
        w_k = w_ref[k]
        dm = d - mu_k
        g = jnp.exp(-GAMMA * (dm * dm))
        f_d = f_d + w_k * g
        fp_d = fp_d + ((-2.0 * GAMMA) * w_k) * dm * g

    # ---- total energy (scalar -> SMEM) ----
    pair_e = mask * s * f_d
    e_ref[0, 0] = 0.5 * jnp.sum(pair_e)

    # ---- analytic forces: F_i = - dE/dr_i  (mask applied before 1/d) ----
    coef = (mask * s * fp_d) / d                         # (N, N), 0 on diag
    gx = jnp.sum(coef * dx, axis=1, keepdims=True)       # (N, 1)
    gy = jnp.sum(coef * dy, axis=1, keepdims=True)
    gz = jnp.sum(coef * dz, axis=1, keepdims=True)

    # lane-dense store: one unmasked (N,128) write; x,y,z live in lanes 0..2
    lane = jax.lax.broadcasted_iota(jnp.int32, (n, LANE), 1)
    out = jnp.where(lane == 0, -gx, 0.0)
    out = jnp.where(lane == 1, -gy, out)
    out = jnp.where(lane == 2, -gz, out)
    f_ref[...] = out


def _make_params(key):
    k_emb, k_w = jax.random.split(key)
    embedding = jax.random.normal(k_emb, (MAX_Z, EMB_DIM), dtype=jnp.float32) * 0.1
    rbf_mu = jnp.linspace(0.5, 5.0, N_RBF, dtype=jnp.float32)      # (K,)
    rbf_w = jax.random.normal(k_w, (N_RBF,), dtype=jnp.float32) * 0.05
    return {"embedding": embedding, "rbf_mu": rbf_mu, "rbf_w": rbf_w}


@jax.jit
def _batched_energy_forces(z, positions, params):
    """Jitted hot path: z (B,N) int32, positions (B,N,3) f32 -> (B,), (B,N,3)."""
    emb = jnp.take(params["embedding"], z, axis=0)          # (B, N, D)
    pos = positions.astype(jnp.float32)                     # (B, N, 3)
    pos_t = jnp.swapaxes(pos, 1, 2)                         # (B, 3, N)
    b, n, _ = pos.shape

    energy, f_pad = pl.pallas_call(
        _trip_energy_kernel,
        grid=(b,),
        out_shape=(
            jax.ShapeDtypeStruct((b, 1), jnp.float32),        # energy (SMEM)
            jax.ShapeDtypeStruct((b, n, LANE), jnp.float32),  # padded forces
        ),
        in_specs=[
            pl.BlockSpec(memory_space=pltpu.MemorySpace.SMEM),      # rbf_mu (K,)
            pl.BlockSpec(memory_space=pltpu.MemorySpace.SMEM),      # rbf_w  (K,)
            pl.BlockSpec((None, n, 3), lambda i: (i, 0, 0)),        # pos
            pl.BlockSpec((None, 3, n), lambda i: (i, 0, 0)),        # pos^T
            pl.BlockSpec((None, n, EMB_DIM), lambda i: (i, 0, 0)),  # emb
        ],
        out_specs=(
            pl.BlockSpec((1, 1), lambda i: (i, 0),
                         memory_space=pltpu.MemorySpace.SMEM),
            pl.BlockSpec((None, n, LANE), lambda i: (i, 0, 0)),
        ),
        compiler_params=pltpu.CompilerParams(
            dimension_semantics=("parallel",)),                     # 2 TCs on v7x
    )(params["rbf_mu"], params["rbf_w"], pos, pos_t, emb)

    forces = f_pad[:, :, :3]            # free layout plumbing outside the kernel
    return energy[:, 0], forces


def se3_module_forward(species, positions, params, forces=True):
    """JAX/Pallas equivalent of SE3Module.forward(species, positions, forces).

    The device work (gather + kernel) is a single jitted call; the float()
    conversion (PyTorch .item() parity) happens only here, at the API boundary.
    Batch users should call _batched_energy_forces directly.
    """
    # species symbol -> atomic number (python glue, mirrors torch.tensor([...]))
    z = jnp.array([[SPECIES_DICT[s] for s in species]], dtype=jnp.int32)  # (1, N)
    # TODO(synk): GraphConstructor / DGL graph is replaced by the implicit
    # fully-connected all-pairs interaction inside the kernel (cutoff = inf).
    pos = positions.astype(jnp.float32)[None]                            # (1, N, 3)
    energy, frc = _batched_energy_forces(z, pos, params)
    energy_scalar = float(energy[0])                                     # .item() parity
    if forces:
        return energy_scalar, frc[0]
    return energy_scalar


if __name__ == "__main__":
    key = jax.random.PRNGKey(0)
    k_pos, k_param = jax.random.split(key)

    species = ['O', 'H', 'H', 'C', 'H', 'H', 'H', 'N']   # 8 atoms
    positions = jax.random.normal(k_pos, (N_ATOMS, 3), dtype=jnp.float32) * 2.0
    params = _make_params(k_param)

    # --- single-molecule forward (API parity with SE3Module.forward) ---
    energy, forces = se3_module_forward(species, positions, params, forces=True)
    jax.block_until_ready(forces)
    assert isinstance(energy, float)
    assert forces.shape == (N_ATOMS, 3)
    assert bool(jnp.all(jnp.isfinite(forces)))

    # --- batched path (B=2): jitted core, parallel batch grid axis ---
    z2 = jnp.array([[SPECIES_DICT[s] for s in species]] * 2, dtype=jnp.int32)
    pos2 = jnp.stack([positions, positions + 0.1])
    e2, f2 = _batched_energy_forces(z2, pos2, params)
    jax.block_until_ready((e2, f2))
    assert e2.shape == (2,) and f2.shape == (2, N_ATOMS, 3)
    assert bool(jnp.all(jnp.isfinite(f2)))
    assert bool(jnp.all(jnp.isfinite(e2)))

    print("KERNEL_OK")
</pallas_src>

<mosaic_0001>
module attributes {stable_mosaic.version = 11 : i64} {
  func.func @_trip_energy_kernel(%arg0: i32, %arg1: memref<16xf32, #tpu.memory_space<smem>>, %arg2: memref<16xf32, #tpu.memory_space<smem>>, %arg3: memref<1x8x3xf32, #tpu.memory_space<vmem>>, %arg4: memref<1x3x8xf32, #tpu.memory_space<vmem>>, %arg5: memref<1x8x32xf32, #tpu.memory_space<vmem>>, %arg6: memref<1x1xf32, #tpu.memory_space<smem>>, %arg7: memref<1x8x128xf32, #tpu.memory_space<vmem>>) attributes {dimension_semantics = [#tpu.dimension_semantics<parallel>], iteration_bounds = array<i64: 1>, scalar_prefetch = 0 : i64, scratch_operands = 0 : i64, tpu.core_type = #tpu.core_type<tc>, window_params = [{transform_indices = @transform_0, window_bounds = array<i64: 16>}, {transform_indices = @transform_1, window_bounds = array<i64: 16>}, {transform_indices = @transform_2, window_bounds = array<i64: 1, 8, 3>}, {transform_indices = @transform_3, window_bounds = array<i64: 1, 3, 8>}, {transform_indices = @transform_4, window_bounds = array<i64: 1, 8, 32>}, {transform_indices = @transform_5, window_bounds = array<i64: 1, 1>}, {transform_indices = @transform_6, window_bounds = array<i64: 1, 8, 128>}]} {
    %c0 = arith.constant 0 : index
    %c0_0 = arith.constant 0 : index
    %c0_1 = arith.constant 0 : index
    %0 = vector.load %arg3[%c0, %c0_0, %c0_1] : memref<1x8x3xf32, #tpu.memory_space<vmem>>, vector<1x8x1xf32>
    %1 = vector.shape_cast %0 : vector<1x8x1xf32> to vector<8x1xf32>
    %c0_2 = arith.constant 0 : index
    %c0_3 = arith.constant 0 : index
    %c1 = arith.constant 1 : index
    %2 = vector.load %arg3[%c0_2, %c0_3, %c1] : memref<1x8x3xf32, #tpu.memory_space<vmem>>, vector<1x8x1xf32>
    %3 = vector.shape_cast %2 : vector<1x8x1xf32> to vector<8x1xf32>
    %c0_4 = arith.constant 0 : index
    %c0_5 = arith.constant 0 : index
    %c2 = arith.constant 2 : index
    %4 = vector.load %arg3[%c0_4, %c0_5, %c2] : memref<1x8x3xf32, #tpu.memory_space<vmem>>, vector<1x8x1xf32>
    %5 = vector.shape_cast %4 : vector<1x8x1xf32> to vector<8x1xf32>
    %c0_6 = arith.constant 0 : index
    %c0_7 = arith.constant 0 : index
    %c0_8 = arith.constant 0 : index
    %6 = vector.load %arg4[%c0_6, %c0_7, %c0_8] : memref<1x3x8xf32, #tpu.memory_space<vmem>>, vector<1x1x8xf32>
    %7 = vector.shape_cast %6 : vector<1x1x8xf32> to vector<1x8xf32>
    %c0_9 = arith.constant 0 : index
    %c1_10 = arith.constant 1 : index
    %c0_11 = arith.constant 0 : index
    %8 = vector.load %arg4[%c0_9, %c1_10, %c0_11] : memref<1x3x8xf32, #tpu.memory_space<vmem>>, vector<1x1x8xf32>
    %9 = vector.shape_cast %8 : vector<1x1x8xf32> to vector<1x8xf32>
    %c0_12 = arith.constant 0 : index
    %c2_13 = arith.constant 2 : index
    %c0_14 = arith.constant 0 : index
    %10 = vector.load %arg4[%c0_12, %c2_13, %c0_14] : memref<1x3x8xf32, #tpu.memory_space<vmem>>, vector<1x1x8xf32>
    %11 = vector.shape_cast %10 : vector<1x1x8xf32> to vector<1x8xf32>
    %12 = vector.broadcast %1 : vector<8x1xf32> to vector<8x8xf32>
    %13 = vector.broadcast %7 : vector<1x8xf32> to vector<8x8xf32>
    %14 = arith.subf %12, %13 : vector<8x8xf32>
    %15 = vector.broadcast %3 : vector<8x1xf32> to vector<8x8xf32>
    %16 = vector.broadcast %9 : vector<1x8xf32> to vector<8x8xf32>
    %17 = arith.subf %15, %16 : vector<8x8xf32>
    %18 = vector.broadcast %5 : vector<8x1xf32> to vector<8x8xf32>
    %19 = vector.broadcast %11 : vector<1x8xf32> to vector<8x8xf32>
    %20 = arith.subf %18, %19 : vector<8x8xf32>
    %21 = arith.mulf %14, %14 : vector<8x8xf32>
    %22 = arith.mulf %17, %17 : vector<8x8xf32>
    %23 = arith.addf %21, %22 : vector<8x8xf32>
    %24 = arith.mulf %20, %20 : vector<8x8xf32>
    %25 = arith.addf %23, %24 : vector<8x8xf32>
    %cst = arith.constant 9.99999996E-13 : f32
    %26 = vector.broadcast %cst : f32 to vector<8x8xf32>
    %27 = arith.addf %25, %26 : vector<8x8xf32>
    %28 = math.sqrt %27 : vector<8x8xf32>
    %29 = tpu.iota {dimensions = array<i32: 0>} : vector<8x8xi32>
    %30 = tpu.iota {dimensions = array<i32: 1>} : vector<8x8xi32>
    %31 = arith.cmpi ne, %29, %30 : vector<8x8xi32>
    %32 = arith.extui %31 : vector<8x8xi1> to vector<8x8xi32>
    %33 = arith.sitofp %32 : vector<8x8xi32> to vector<8x8xf32>
    %c0_15 = arith.constant 0 : index
    %c0_16 = arith.constant 0 : index
    %c0_17 = arith.constant 0 : index
    %34 = vector.load %arg5[%c0_15, %c0_16, %c0_17] : memref<1x8x32xf32, #tpu.memory_space<vmem>>, vector<1x8x32xf32>
    %35 = vector.shape_cast %34 : vector<1x8x32xf32> to vector<8x32xf32>
    %cst_18 = arith.constant dense<0.000000e+00> : vector<8x8xf32>
    %36 = tpu.matmul %35, %35, %cst_18 {dimension_numbers = #tpu.dot_dimension_numbers<[1], [1], [0], [0], [0, 0, 1, 0], [], []>} : vector<8x32xf32>, vector<8x32xf32>, vector<8x8xf32> -> vector<8x8xf32>
    %cst_19 = arith.constant 0.000000e+00 : f32
    %37 = vector.broadcast %cst_19 : f32 to vector<8x8xf32>
    %cst_20 = arith.constant 0.000000e+00 : f32
    %38 = vector.broadcast %cst_20 : f32 to vector<8x8xf32>
    %c0_21 = arith.constant 0 : index
    %39 = memref.load %arg1[%c0_21] : memref<16xf32, #tpu.memory_space<smem>>
    %c0_22 = arith.constant 0 : index
    %40 = memref.load %arg2[%c0_22] : memref<16xf32, #tpu.memory_space<smem>>
    %41 = vector.broadcast %39 : f32 to vector<8x8xf32>
    %42 = arith.subf %28, %41 : vector<8x8xf32>
    %43 = arith.mulf %42, %42 : vector<8x8xf32>
    %cst_23 = arith.constant -4.000000e+00 : f32
    %44 = vector.broadcast %cst_23 : f32 to vector<8x8xf32>
    %45 = arith.mulf %44, %43 : vector<8x8xf32>
    %46 = math.exp %45 : vector<8x8xf32>
    %47 = vector.broadcast %40 : f32 to vector<8x8xf32>
    %48 = arith.mulf %47, %46 : vector<8x8xf32>
    %49 = arith.addf %37, %48 : vector<8x8xf32>
    %cst_24 = arith.constant -8.000000e+00 : f32
    %50 = arith.mulf %cst_24, %40 : f32
    %51 = vector.broadcast %50 : f32 to vector<8x8xf32>
    %52 = arith.mulf %51, %42 : vector<8x8xf32>
    %53 = arith.mulf %52, %46 : vector<8x8xf32>
    %54 = arith.addf %38, %53 : vector<8x8xf32>
    %c1_25 = arith.constant 1 : index
    %55 = memref.load %arg1[%c1_25] : memref<16xf32, #tpu.memory_space<smem>>
    %c1_26 = arith.constant 1 : index
    %56 = memref.load %arg2[%c1_26] : memref<16xf32, #tpu.memory_space<smem>>
    %57 = vector.broadcast %55 : f32 to vector<8x8xf32>
    %58 = arith.subf %28, %57 : vector<8x8xf32>
    %59 = arith.mulf %58, %58 : vector<8x8xf32>
    %cst_27 = arith.constant -4.000000e+00 : f32
    %60 = vector.broadcast %cst_27 : f32 to vector<8x8xf32>
    %61 = arith.mulf %60, %59 : vector<8x8xf32>
    %62 = math.exp %61 : vector<8x8xf32>
    %63 = vector.broadcast %56 : f32 to vector<8x8xf32>
    %64 = arith.mulf %63, %62 : vector<8x8xf32>
    %65 = arith.addf %49, %64 : vector<8x8xf32>
    %cst_28 = arith.constant -8.000000e+00 : f32
    %66 = arith.mulf %cst_28, %56 : f32
    %67 = vector.broadcast %66 : f32 to vector<8x8xf32>
    %68 = arith.mulf %67, %58 : vector<8x8xf32>
    %69 = arith.mulf %68, %62 : vector<8x8xf32>
    %70 = arith.addf %54, %69 : vector<8x8xf32>
    %c2_29 = arith.constant 2 : index
    %71 = memref.load %arg1[%c2_29] : memref<16xf32, #tpu.memory_space<smem>>
    %c2_30 = arith.constant 2 : index
    %72 = memref.load %arg2[%c2_30] : memref<16xf32, #tpu.memory_space<smem>>
    %73 = vector.broadcast %71 : f32 to vector<8x8xf32>
    %74 = arith.subf %28, %73 : vector<8x8xf32>
    %75 = arith.mulf %74, %74 : vector<8x8xf32>
    %cst_31 = arith.constant -4.000000e+00 : f32
    %76 = vector.broadcast %cst_31 : f32 to vector<8x8xf32>
    %77 = arith.mulf %76, %75 : vector<8x8xf32>
    %78 = math.exp %77 : vector<8x8xf32>
    %79 = vector.broadcast %72 : f32 to vector<8x8xf32>
    %80 = arith.mulf %79, %78 : vector<8x8xf32>
    %81 = arith.addf %65, %80 : vector<8x8xf32>
    %cst_32 = arith.constant -8.000000e+00 : f32
    %82 = arith.mulf %cst_32, %72 : f32
    %83 = vector.broadcast %82 : f32 to vector<8x8xf32>
    %84 = arith.mulf %83, %74 : vector<8x8xf32>
    %85 = arith.mulf %84, %78 : vector<8x8xf32>
    %86 = arith.addf %70, %85 : vector<8x8xf32>
    %c3 = arith.constant 3 : index
    %87 = memref.load %arg1[%c3] : memref<16xf32, #tpu.memory_space<smem>>
    %c3_33 = arith.constant 3 : index
    %88 = memref.load %arg2[%c3_33] : memref<16xf32, #tpu.memory_space<smem>>
    %89 = vector.broadcast %87 : f32 to vector<8x8xf32>
    %90 = arith.subf %28, %89 : vector<8x8xf32>
    %91 = arith.mulf %90, %90 : vector<8x8xf32>
    %cst_34 = arith.constant -4.000000e+00 : f32
    %92 = vector.broadcast %cst_34 : f32 to vector<8x8xf32>
    %93 = arith.mulf %92, %91 : vector<8x8xf32>
    %94 = math.exp %93 : vector<8x8xf32>
    %95 = vector.broadcast %88 : f32 to vector<8x8xf32>
    %96 = arith.mulf %95, %94 : vector<8x8xf32>
    %97 = arith.addf %81, %96 : vector<8x8xf32>
    %cst_35 = arith.constant -8.000000e+00 : f32
    %98 = arith.mulf %cst_35, %88 : f32
    %99 = vector.broadcast %98 : f32 to vector<8x8xf32>
    %100 = arith.mulf %99, %90 : vector<8x8xf32>
    %101 = arith.mulf %100, %94 : vector<8x8xf32>
    %102 = arith.addf %86, %101 : vector<8x8xf32>
    %c4 = arith.constant 4 : index
    %103 = memref.load %arg1[%c4] : memref<16xf32, #tpu.memory_space<smem>>
    %c4_36 = arith.constant 4 : index
    %104 = memref.load %arg2[%c4_36] : memref<16xf32, #tpu.memory_space<smem>>
    %105 = vector.broadcast %103 : f32 to vector<8x8xf32>
    %106 = arith.subf %28, %105 : vector<8x8xf32>
    %107 = arith.mulf %106, %106 : vector<8x8xf32>
    %cst_37 = arith.constant -4.000000e+00 : f32
    %108 = vector.broadcast %cst_37 : f32 to vector<8x8xf32>
    %109 = arith.mulf %108, %107 : vector<8x8xf32>
    %110 = math.exp %109 : vector<8x8xf32>
    %111 = vector.broadcast %104 : f32 to vector<8x8xf32>
    %112 = arith.mulf %111, %110 : vector<8x8xf32>
    %113 = arith.addf %97, %112 : vector<8x8xf32>
    %cst_38 = arith.constant -8.000000e+00 : f32
    %114 = arith.mulf %cst_38, %104 : f32
    %115 = vector.broadcast %114 : f32 to vector<8x8xf32>
    %116 = arith.mulf %115, %106 : vector<8x8xf32>
    %117 = arith.mulf %116, %110 : vector<8x8xf32>
    %118 = arith.addf %102, %117 : vector<8x8xf32>
    %c5 = arith.constant 5 : index
    %119 = memref.load %arg1[%c5] : memref<16xf32, #tpu.memory_space<smem>>
    %c5_39 = arith.constant 5 : index
    %120 = memref.load %arg2[%c5_39] : memref<16xf32, #tpu.memory_space<smem>>
    %121 = vector.broadcast %119 : f32 to vector<8x8xf32>
    %122 = arith.subf %28, %121 : vector<8x8xf32>
    %123 = arith.mulf %122, %122 : vector<8x8xf32>
    %cst_40 = arith.constant -4.000000e+00 : f32
    %124 = vector.broadcast %cst_40 : f32 to vector<8x8xf32>
    %125 = arith.mulf %124, %123 : vector<8x8xf32>
    %126 = math.exp %125 : vector<8x8xf32>
    %127 = vector.broadcast %120 : f32 to vector<8x8xf32>
    %128 = arith.mulf %127, %126 : vector<8x8xf32>
    %129 = arith.addf %113, %128 : vector<8x8xf32>
    %cst_41 = arith.constant -8.000000e+00 : f32
    %130 = arith.mulf %cst_41, %120 : f32
    %131 = vector.broadcast %130 : f32 to vector<8x8xf32>
    %132 = arith.mulf %131, %122 : vector<8x8xf32>
    %133 = arith.mulf %132, %126 : vector<8x8xf32>
    %134 = arith.addf %118, %133 : vector<8x8xf32>
    %c6 = arith.constant 6 : index
    %135 = memref.load %arg1[%c6] : memref<16xf32, #tpu.memory_space<smem>>
    %c6_42 = arith.constant 6 : index
    %136 = memref.load %arg2[%c6_42] : memref<16xf32, #tpu.memory_space<smem>>
    %137 = vector.broadcast %135 : f32 to vector<8x8xf32>
    %138 = arith.subf %28, %137 : vector<8x8xf32>
    %139 = arith.mulf %138, %138 : vector<8x8xf32>
    %cst_43 = arith.constant -4.000000e+00 : f32
    %140 = vector.broadcast %cst_43 : f32 to vector<8x8xf32>
    %141 = arith.mulf %140, %139 : vector<8x8xf32>
    %142 = math.exp %141 : vector<8x8xf32>
    %143 = vector.broadcast %136 : f32 to vector<8x8xf32>
    %144 = arith.mulf %143, %142 : vector<8x8xf32>
    %145 = arith.addf %129, %144 : vector<8x8xf32>
    %cst_44 = arith.constant -8.000000e+00 : f32
    %146 = arith.mulf %cst_44, %136 : f32
    %147 = vector.broadcast %146 : f32 to vector<8x8xf32>
    %148 = arith.mulf %147, %138 : vector<8x8xf32>
    %149 = arith.mulf %148, %142 : vector<8x8xf32>
    %150 = arith.addf %134, %149 : vector<8x8xf32>
    %c7 = arith.constant 7 : index
    %151 = memref.load %arg1[%c7] : memref<16xf32, #tpu.memory_space<smem>>
    %c7_45 = arith.constant 7 : index
    %152 = memref.load %arg2[%c7_45] : memref<16xf32, #tpu.memory_space<smem>>
    %153 = vector.broadcast %151 : f32 to vector<8x8xf32>
    %154 = arith.subf %28, %153 : vector<8x8xf32>
    %155 = arith.mulf %154, %154 : vector<8x8xf32>
    %cst_46 = arith.constant -4.000000e+00 : f32
    %156 = vector.broadcast %cst_46 : f32 to vector<8x8xf32>
    %157 = arith.mulf %156, %155 : vector<8x8xf32>
    %158 = math.exp %157 : vector<8x8xf32>
    %159 = vector.broadcast %152 : f32 to vector<8x8xf32>
    %160 = arith.mulf %159, %158 : vector<8x8xf32>
    %161 = arith.addf %145, %160 : vector<8x8xf32>
    %cst_47 = arith.constant -8.000000e+00 : f32
    %162 = arith.mulf %cst_47, %152 : f32
    %163 = vector.broadcast %162 : f32 to vector<8x8xf32>
    %164 = arith.mulf %163, %154 : vector<8x8xf32>
    %165 = arith.mulf %164, %158 : vector<8x8xf32>
    %166 = arith.addf %150, %165 : vector<8x8xf32>
    %c8 = arith.constant 8 : index
    %167 = memref.load %arg1[%c8] : memref<16xf32, #tpu.memory_space<smem>>
    %c8_48 = arith.constant 8 : index
    %168 = memref.load %arg2[%c8_48] : memref<16xf32, #tpu.memory_space<smem>>
    %169 = vector.broadcast %167 : f32 to vector<8x8xf32>
    %170 = arith.subf %28, %169 : vector<8x8xf32>
    %171 = arith.mulf %170, %170 : vector<8x8xf32>
    %cst_49 = arith.constant -4.000000e+00 : f32
    %172 = vector.broadcast %cst_49 : f32 to vector<8x8xf32>
    %173 = arith.mulf %172, %171 : vector<8x8xf32>
    %174 = math.exp %173 : vector<8x8xf32>
    %175 = vector.broadcast %168 : f32 to vector<8x8xf32>
    %176 = arith.mulf %175, %174 : vector<8x8xf32>
    %177 = arith.addf %161, %176 : vector<8x8xf32>
    %cst_50 = arith.constant -8.000000e+00 : f32
    %178 = arith.mulf %cst_50, %168 : f32
    %179 = vector.broadcast %178 : f32 to vector<8x8xf32>
    %180 = arith.mulf %179, %170 : vector<8x8xf32>
    %181 = arith.mulf %180, %174 : vector<8x8xf32>
    %182 = arith.addf %166, %181 : vector<8x8xf32>
    %c9 = arith.constant 9 : index
    %183 = memref.load %arg1[%c9] : memref<16xf32, #tpu.memory_space<smem>>
    %c9_51 = arith.constant 9 : index
    %184 = memref.load %arg2[%c9_51] : memref<16xf32, #tpu.memory_space<smem>>
    %185 = vector.broadcast %183 : f32 to vector<8x8xf32>
    %186 = arith.subf %28, %185 : vector<8x8xf32>
    %187 = arith.mulf %186, %186 : vector<8x8xf32>
    %cst_52 = arith.constant -4.000000e+00 : f32
    %188 = vector.broadcast %cst_52 : f32 to vector<8x8xf32>
    %189 = arith.mulf %188, %187 : vector<8x8xf32>
    %190 = math.exp %189 : vector<8x8xf32>
    %191 = vector.broadcast %184 : f32 to vector<8x8xf32>
    %192 = arith.mulf %191, %190 : vector<8x8xf32>
    %193 = arith.addf %177, %192 : vector<8x8xf32>
    %cst_53 = arith.constant -8.000000e+00 : f32
    %194 = arith.mulf %cst_53, %184 : f32
    %195 = vector.broadcast %194 : f32 to vector<8x8xf32>
    %196 = arith.mulf %195, %186 : vector<8x8xf32>
    %197 = arith.mulf %196, %190 : vector<8x8xf32>
    %198 = arith.addf %182, %197 : vector<8x8xf32>
    %c10 = arith.constant 10 : index
    %199 = memref.load %arg1[%c10] : memref<16xf32, #tpu.memory_space<smem>>
    %c10_54 = arith.constant 10 : index
    %200 = memref.load %arg2[%c10_54] : memref<16xf32, #tpu.memory_space<smem>>
    %201 = vector.broadcast %199 : f32 to vector<8x8xf32>
    %202 = arith.subf %28, %201 : vector<8x8xf32>
    %203 = arith.mulf %202, %202 : vector<8x8xf32>
    %cst_55 = arith.constant -4.000000e+00 : f32
    %204 = vector.broadcast %cst_55 : f32 to vector<8x8xf32>
    %205 = arith.mulf %204, %203 : vector<8x8xf32>
    %206 = math.exp %205 : vector<8x8xf32>
    %207 = vector.broadcast %200 : f32 to vector<8x8xf32>
    %208 = arith.mulf %207, %206 : vector<8x8xf32>
    %209 = arith.addf %193, %208 : vector<8x8xf32>
    %cst_56 = arith.constant -8.000000e+00 : f32
    %210 = arith.mulf %cst_56, %200 : f32
    %211 = vector.broadcast %210 : f32 to vector<8x8xf32>
    %212 = arith.mulf %211, %202 : vector<8x8xf32>
    %213 = arith.mulf %212, %206 : vector<8x8xf32>
    %214 = arith.addf %198, %213 : vector<8x8xf32>
    %c11 = arith.constant 11 : index
    %215 = memref.load %arg1[%c11] : memref<16xf32, #tpu.memory_space<smem>>
    %c11_57 = arith.constant 11 : index
    %216 = memref.load %arg2[%c11_57] : memref<16xf32, #tpu.memory_space<smem>>
    %217 = vector.broadcast %215 : f32 to vector<8x8xf32>
    %218 = arith.subf %28, %217 : vector<8x8xf32>
    %219 = arith.mulf %218, %218 : vector<8x8xf32>
    %cst_58 = arith.constant -4.000000e+00 : f32
    %220 = vector.broadcast %cst_58 : f32 to vector<8x8xf32>
    %221 = arith.mulf %220, %219 : vector<8x8xf32>
    %222 = math.exp %221 : vector<8x8xf32>
    %223 = vector.broadcast %216 : f32 to vector<8x8xf32>
    %224 = arith.mulf %223, %222 : vector<8x8xf32>
    %225 = arith.addf %209, %224 : vector<8x8xf32>
    %cst_59 = arith.constant -8.000000e+00 : f32
    %226 = arith.mulf %cst_59, %216 : f32
    %227 = vector.broadcast %226 : f32 to vector<8x8xf32>
    %228 = arith.mulf %227, %218 : vector<8x8xf32>
    %229 = arith.mulf %228, %222 : vector<8x8xf32>
    %230 = arith.addf %214, %229 : vector<8x8xf32>
    %c12 = arith.constant 12 : index
    %231 = memref.load %arg1[%c12] : memref<16xf32, #tpu.memory_space<smem>>
    %c12_60 = arith.constant 12 : index
    %232 = memref.load %arg2[%c12_60] : memref<16xf32, #tpu.memory_space<smem>>
    %233 = vector.broadcast %231 : f32 to vector<8x8xf32>
    %234 = arith.subf %28, %233 : vector<8x8xf32>
    %235 = arith.mulf %234, %234 : vector<8x8xf32>
    %cst_61 = arith.constant -4.000000e+00 : f32
    %236 = vector.broadcast %cst_61 : f32 to vector<8x8xf32>
    %237 = arith.mulf %236, %235 : vector<8x8xf32>
    %238 = math.exp %237 : vector<8x8xf32>
    %239 = vector.broadcast %232 : f32 to vector<8x8xf32>
    %240 = arith.mulf %239, %238 : vector<8x8xf32>
    %241 = arith.addf %225, %240 : vector<8x8xf32>
    %cst_62 = arith.constant -8.000000e+00 : f32
    %242 = arith.mulf %cst_62, %232 : f32
    %243 = vector.broadcast %242 : f32 to vector<8x8xf32>
    %244 = arith.mulf %243, %234 : vector<8x8xf32>
    %245 = arith.mulf %244, %238 : vector<8x8xf32>
    %246 = arith.addf %230, %245 : vector<8x8xf32>
    %c13 = arith.constant 13 : index
    %247 = memref.load %arg1[%c13] : memref<16xf32, #tpu.memory_space<smem>>
    %c13_63 = arith.constant 13 : index
    %248 = memref.load %arg2[%c13_63] : memref<16xf32, #tpu.memory_space<smem>>
    %249 = vector.broadcast %247 : f32 to vector<8x8xf32>
    %250 = arith.subf %28, %249 : vector<8x8xf32>
    %251 = arith.mulf %250, %250 : vector<8x8xf32>
    %cst_64 = arith.constant -4.000000e+00 : f32
    %252 = vector.broadcast %cst_64 : f32 to vector<8x8xf32>
    %253 = arith.mulf %252, %251 : vector<8x8xf32>
    %254 = math.exp %253 : vector<8x8xf32>
    %255 = vector.broadcast %248 : f32 to vector<8x8xf32>
    %256 = arith.mulf %255, %254 : vector<8x8xf32>
    %257 = arith.addf %241, %256 : vector<8x8xf32>
    %cst_65 = arith.constant -8.000000e+00 : f32
    %258 = arith.mulf %cst_65, %248 : f32
    %259 = vector.broadcast %258 : f32 to vector<8x8xf32>
    %260 = arith.mulf %259, %250 : vector<8x8xf32>
    %261 = arith.mulf %260, %254 : vector<8x8xf32>
    %262 = arith.addf %246, %261 : vector<8x8xf32>
    %c14 = arith.constant 14 : index
    %263 = memref.load %arg1[%c14] : memref<16xf32, #tpu.memory_space<smem>>
    %c14_66 = arith.constant 14 : index
    %264 = memref.load %arg2[%c14_66] : memref<16xf32, #tpu.memory_space<smem>>
    %265 = vector.broadcast %263 : f32 to vector<8x8xf32>
    %266 = arith.subf %28, %265 : vector<8x8xf32>
    %267 = arith.mulf %266, %266 : vector<8x8xf32>
    %cst_67 = arith.constant -4.000000e+00 : f32
    %268 = vector.broadcast %cst_67 : f32 to vector<8x8xf32>
    %269 = arith.mulf %268, %267 : vector<8x8xf32>
    %270 = math.exp %269 : vector<8x8xf32>
    %271 = vector.broadcast %264 : f32 to vector<8x8xf32>
    %272 = arith.mulf %271, %270 : vector<8x8xf32>
    %273 = arith.addf %257, %272 : vector<8x8xf32>
    %cst_68 = arith.constant -8.000000e+00 : f32
    %274 = arith.mulf %cst_68, %264 : f32
    %275 = vector.broadcast %274 : f32 to vector<8x8xf32>
    %276 = arith.mulf %275, %266 : vector<8x8xf32>
    %277 = arith.mulf %276, %270 : vector<8x8xf32>
    %278 = arith.addf %262, %277 : vector<8x8xf32>
    %c15 = arith.constant 15 : index
    %279 = memref.load %arg1[%c15] : memref<16xf32, #tpu.memory_space<smem>>
    %c15_69 = arith.constant 15 : index
    %280 = memref.load %arg2[%c15_69] : memref<16xf32, #tpu.memory_space<smem>>
    %281 = vector.broadcast %279 : f32 to vector<8x8xf32>
    %282 = arith.subf %28, %281 : vector<8x8xf32>
    %283 = arith.mulf %282, %282 : vector<8x8xf32>
    %cst_70 = arith.constant -4.000000e+00 : f32
    %284 = vector.broadcast %cst_70 : f32 to vector<8x8xf32>
    %285 = arith.mulf %284, %283 : vector<8x8xf32>
    %286 = math.exp %285 : vector<8x8xf32>
    %287 = vector.broadcast %280 : f32 to vector<8x8xf32>
    %288 = arith.mulf %287, %286 : vector<8x8xf32>
    %289 = arith.addf %273, %288 : vector<8x8xf32>
    %cst_71 = arith.constant -8.000000e+00 : f32
    %290 = arith.mulf %cst_71, %280 : f32
    %291 = vector.broadcast %290 : f32 to vector<8x8xf32>
    %292 = arith.mulf %291, %282 : vector<8x8xf32>
    %293 = arith.mulf %292, %286 : vector<8x8xf32>
    %294 = arith.addf %278, %293 : vector<8x8xf32>
    %295 = arith.mulf %33, %36 : vector<8x8xf32>
    %296 = arith.mulf %295, %289 : vector<8x8xf32>
    %297 = vector.shape_cast %296 : vector<8x8xf32> to vector<1x8x8xf32>
    %cst_72 = arith.constant dense<0.000000e+00> : vector<1xf32>
    %298 = vector.multi_reduction <add>, %297, %cst_72 [1, 2] : vector<1x8x8xf32> to vector<1xf32>
    %299 = vector.shape_cast %298 : vector<1xf32> to vector<1x1x1xf32>
    %300 = vector.extract %299[0, 0, 0] : f32 from vector<1x1x1xf32>
    %cst_73 = arith.constant 5.000000e-01 : f32
    %301 = arith.mulf %cst_73, %300 : f32
    %c0_74 = arith.constant 0 : index
    %c0_75 = arith.constant 0 : index
    %302 = memref.load %arg6[%c0_74, %c0_75] : memref<1x1xf32, #tpu.memory_space<smem>>
    memref.store %301, %arg6[%c0_74, %c0_75] : memref<1x1xf32, #tpu.memory_space<smem>>
    %303 = arith.mulf %33, %36 : vector<8x8xf32>
    %304 = arith.mulf %303, %294 : vector<8x8xf32>
    %305 = arith.divf %304, %28 : vector<8x8xf32>
    %306 = arith.mulf %305, %14 : vector<8x8xf32>
    %cst_76 = arith.constant dense<0.000000e+00> : vector<8xf32>
    %307 = vector.multi_reduction <add>, %306, %cst_76 [1] : vector<8x8xf32> to vector<8xf32>
    %308 = vector.shape_cast %307 : vector<8xf32> to vector<8x1xf32>
    %309 = arith.mulf %305, %17 : vector<8x8xf32>
    %cst_77 = arith.constant dense<0.000000e+00> : vector<8xf32>
    %310 = vector.multi_reduction <add>, %309, %cst_77 [1] : vector<8x8xf32> to vector<8xf32>
    %311 = vector.shape_cast %310 : vector<8xf32> to vector<8x1xf32>
    %312 = arith.mulf %305, %20 : vector<8x8xf32>
    %cst_78 = arith.constant dense<0.000000e+00> : vector<8xf32>
    %313 = vector.multi_reduction <add>, %312, %cst_78 [1] : vector<8x8xf32> to vector<8xf32>
    %314 = vector.shape_cast %313 : vector<8xf32> to vector<8x1xf32>
    %315 = tpu.iota {dimensions = array<i32: 1>} : vector<8x128xi32>
    %c0_i32 = arith.constant 0 : i32
    %316 = vector.broadcast %c0_i32 : i32 to vector<8x128xi32>
    %317 = arith.cmpi eq, %315, %316 : vector<8x128xi32>
    %cst_79 = arith.constant 0.000000e+00 : f32
    %318 = vector.broadcast %cst_79 : f32 to vector<8x1xf32>
    %319 = arith.subf %318, %308 : vector<8x1xf32>
    %cst_80 = arith.constant 0.000000e+00 : f32
    %320 = vector.shape_cast %319 : vector<8x1xf32> to vector<8x1xf32>
    %321 = vector.broadcast %320 : vector<8x1xf32> to vector<8x128xf32>
    %322 = vector.broadcast %cst_80 : f32 to vector<8x128xf32>
    %323 = arith.select %317, %321, %322 : vector<8x128xi1>, vector<8x128xf32>
    %c1_i32 = arith.constant 1 : i32
    %324 = vector.broadcast %c1_i32 : i32 to vector<8x128xi32>
    %325 = arith.cmpi eq, %315, %324 : vector<8x128xi32>
    %cst_81 = arith.constant 0.000000e+00 : f32
    %326 = vector.broadcast %cst_81 : f32 to vector<8x1xf32>
    %327 = arith.subf %326, %311 : vector<8x1xf32>
    %328 = vector.shape_cast %327 : vector<8x1xf32> to vector<8x1xf32>
    %329 = vector.broadcast %328 : vector<8x1xf32> to vector<8x128xf32>
    %330 = arith.select %325, %329, %323 : vector<8x128xi1>, vector<8x128xf32>
    %c2_i32 = arith.constant 2 : i32
    %331 = vector.broadcast %c2_i32 : i32 to vector<8x128xi32>
    %332 = arith.cmpi eq, %315, %331 : vector<8x128xi32>
    %cst_82 = arith.constant 0.000000e+00 : f32
    %333 = vector.broadcast %cst_82 : f32 to vector<8x1xf32>
    %334 = arith.subf %333, %314 : vector<8x1xf32>
    %335 = vector.shape_cast %334 : vector<8x1xf32> to vector<8x1xf32>
    %336 = vector.broadcast %335 : vector<8x1xf32> to vector<8x128xf32>
    %337 = arith.select %332, %336, %330 : vector<8x128xi1>, vector<8x128xf32>
    %c0_83 = arith.constant 0 : index
    %c0_84 = arith.constant 0 : index
    %c0_85 = arith.constant 0 : index
    %338 = vector.load %arg7[%c0_83, %c0_84, %c0_85] : memref<1x8x128xf32, #tpu.memory_space<vmem>>, vector<1x8x128xf32>
    %339 = vector.shape_cast %338 : vector<1x8x128xf32> to vector<8x128xf32>
    %340 = vector.shape_cast %337 : vector<8x128xf32> to vector<1x8x128xf32>
    tpu.vector_store %arg7[%c0_83, %c0_84, %c0_85], %340 {strides = array<i32>} : memref<1x8x128xf32, #tpu.memory_space<vmem>>, vector<1x8x128xf32>,
    return
  }
  func.func @transform_0(%arg0: i32) -> i32 {
    %c0_i32 = arith.constant 0 : i32
    %c0_i32_0 = arith.constant 0 : i32
    return %c0_i32 : i32
  }
  func.func @transform_1(%arg0: i32) -> i32 {
    %c0_i32 = arith.constant 0 : i32
    %c0_i32_0 = arith.constant 0 : i32
    return %c0_i32 : i32
  }
  func.func @transform_2(%arg0: i32) -> (i32, i32, i32) {
    %c0_i32 = arith.constant 0 : i32
    %c0_i32_0 = arith.constant 0 : i32
    %c0_i32_1 = arith.constant 0 : i32
    return %arg0, %c0_i32, %c0_i32_0 : i32, i32, i32
  }
  func.func @transform_3(%arg0: i32) -> (i32, i32, i32) {
    %c0_i32 = arith.constant 0 : i32
    %c0_i32_0 = arith.constant 0 : i32
    %c0_i32_1 = arith.constant 0 : i32
    return %arg0, %c0_i32, %c0_i32_0 : i32, i32, i32
  }
  func.func @transform_4(%arg0: i32) -> (i32, i32, i32) {
    %c0_i32 = arith.constant 0 : i32
    %c0_i32_0 = arith.constant 0 : i32
    %c0_i32_1 = arith.constant 0 : i32
    return %arg0, %c0_i32, %c0_i32_0 : i32, i32, i32
  }
  func.func @transform_5(%arg0: i32) -> (i32, i32) {
    %c0_i32 = arith.constant 0 : i32
    %c0_i32_0 = arith.constant 0 : i32
    return %arg0, %c0_i32 : i32, i32
  }
  func.func @transform_6(%arg0: i32) -> (i32, i32, i32) {
    %c0_i32 = arith.constant 0 : i32
    %c0_i32_0 = arith.constant 0 : i32
    %c0_i32_1 = arith.constant 0 : i32
    return %arg0, %c0_i32, %c0_i32_0 : i32, i32, i32
  }
}

</mosaic_0001>

<llo_original>
// kernel: _batched_energy_forces.1
$region0: #{_batched_energy_forces.1}
  #allocation0 [shape = 'u32[]', space=smem, size = 0x4, offset = 0x4, fixed_abs, tag = 'smem constant byte address 0x4 - core index']
  #allocation1 [shape = 'u32[72,128]{1,0:T(1,128)}', space=vmem, size = 0x9000, scoped, tag = 'internal scratch']
  %s0 = inlined_call_operand.vmem [shape: f32[16], index: 0, kind: input, shape index: {}]
  %s1 = inlined_call_operand.vmem [shape: f32[16], index: 1, kind: input, shape index: {}]
  %s2 = inlined_call_operand.vmem [shape: f32[1,8,3], index: 2, kind: input, shape index: {}]
  %s3 = inlined_call_operand.vmem [shape: f32[1,3,8], index: 3, kind: input, shape index: {}]
  %s4 = inlined_call_operand.vmem [shape: f32[1,8,32], index: 4, kind: input, shape index: {}]
  %s5 = inlined_call_operand.hbm [shape: f32[1,1], index: 5, kind: output, shape index: {0}]
  %s6 = inlined_call_operand.vmem [shape: f32[1,8,128], index: 6, kind: output, shape index: {1}]
  %7 = xla_tuple %s5, %s6
  %s8 = sld [smem:[#allocation0]]
  $region46: #{_batched_energy_forces.1} parent=0
    _
  %s10 = ssub.s32 1, %s8
  %s11 = scalar_select 0, %s10, %s8
  $region1: #{_batched_energy_forces.1} parent=0
    #allocation2 [shape = 'u8[512]{0}', space=smem, size = 0x200, scoped, tag = 'input window, operand 0, single buffered']
    #allocation3 [shape = 's32[1]{0}', space=sflag, size = 0x4, scoped, tag = 'scoped memory for _batched_energy_forces.1']
    #allocation4 [shape = 's32[1]{0}', space=sflag, size = 0x4, scoped, tag = 'scoped memory for _batched_energy_forces.1']
    #allocation5 [shape = 'u8[512]{0}', space=smem, size = 0x200, scoped, tag = 'input window, operand 1, single buffered']
    #allocation6 [shape = 's32[1]{0}', space=sflag, size = 0x4, scoped, tag = 'scoped memory for _batched_energy_forces.1']
    #allocation7 [shape = 'u8[512]{0}', space=smem, size = 0x200, scoped, tag = 'output window, operand 0, single buffered']
    %12 = vsyncpa [#allocation4], 0
    %13 = vsyncpa [#allocation6], 0
    %14 = vsyncpa [#allocation3], 0
    // Predicated region
    $region2: #{_batched_energy_forces.1} parent=1 // pred_check
      _
    $region3: #{_batched_energy_forces.1} parent=1 // pred_check_branch
      %16 = sbr.rel (0) target = $region5
    $region4: #{_batched_energy_forces.1} parent=1 // pred_region
      %18 = vsyncadd [#allocation4], 0
      %s20 = sshll.u32 %s0, 4
      %s21 = int_to_ptr.vmem [resolvable:$true] %s20
      %23 = dma.vmem_to_smem %s21, 16, [#allocation2], [#allocation4]
    $region5: #{_batched_energy_forces.1} parent=1 // pred_fallthru
      _
    // Predicated region
    $region6: #{_batched_energy_forces.1} parent=1 // pred_check
      _
    $region7: #{_batched_energy_forces.1} parent=1 // pred_check_branch
      %25 = sbr.rel (0) target = $region9
    $region8: #{_batched_energy_forces.1} parent=1 // pred_region
      %27 = vsyncadd [#allocation6], 0
      %s29 = sshll.u32 %s1, 4
      %s30 = int_to_ptr.vmem [resolvable:$true] %s29
      %32 = dma.vmem_to_smem %s30, 16, [#allocation5], [#allocation6]
    $region9: #{_batched_energy_forces.1} parent=1 // pred_fallthru
      _
    // Predicated region
    $region10: #{_batched_energy_forces.1} parent=1 // pred_check
      _
    $region11: #{_batched_energy_forces.1} parent=1 // pred_check_branch
      %34 = sbr.rel (0) target = $region13
    $region12: #{_batched_energy_forces.1} parent=1 // pred_region
      _
    $region13: #{_batched_energy_forces.1} parent=1 // pred_fallthru
      _
    // Predicated region
    $region14: #{_batched_energy_forces.1} parent=1 // pred_check
      _
    $region15: #{_batched_energy_forces.1} parent=1 // pred_check_branch
      %36 = sbr.rel (0) target = $region17
    $region16: #{_batched_energy_forces.1} parent=1 // pred_region
      _
    $region17: #{_batched_energy_forces.1} parent=1 // pred_fallthru
      _
    // Predicated region
    $region18: #{_batched_energy_forces.1} parent=1 // pred_check
      _
    $region19: #{_batched_energy_forces.1} parent=1 // pred_check_branch
      %38 = sbr.rel (0) target = $region21
    $region20: #{_batched_energy_forces.1} parent=1 // pred_region
      _
    $region21: #{_batched_energy_forces.1} parent=1 // pred_fallthru
      _
    // Predicated region
    $region22: #{_batched_energy_forces.1} parent=1 // pred_check
      _
    $region23: #{_batched_energy_forces.1} parent=1 // pred_check_branch
      %40 = sbr.rel (0) target = $region25
    $region24: #{_batched_energy_forces.1} parent=1 // pred_region
      %42 = dma.done [#allocation4], 16
    $region25: #{_batched_energy_forces.1} parent=1 // pred_fallthru
      _
    // Predicated region
    $region26: #{_batched_energy_forces.1} parent=1 // pred_check
      _
    $region27: #{_batched_energy_forces.1} parent=1 // pred_check_branch
      %44 = sbr.rel (0) target = $region29
    $region28: #{_batched_energy_forces.1} parent=1 // pred_region
      %46 = dma.done [#allocation6], 16
    $region29: #{_batched_energy_forces.1} parent=1 // pred_fallthru
      _
    %47 = sfence
    %v48 = vld [vmem:[%s2] sm:$0xff]
    %v49 = vld [vmem:[%s3] sm:$0x1]
    %v50 = vld [vmem:[%s3 + $0x1] sm:$0x1]
    %v51 = vld [vmem:[%s3 + $0x2] sm:$0x1]
    %53 = vset.pattern.permute.xlu0 0
    %54 = vperm.xlu0 %53, %v48
    %v55 = vpop.permute.xlu0 %54
    %v57 = vperm.slane %v49, 0
    %v58 = vsub.f32 %v55, %v57
    %59 = vset.pattern.permute.xlu0 1
    %60 = vperm.xlu0 %59, %v48
    %v61 = vpop.permute.xlu0 %60
    %v63 = vperm.slane %v50, 0
    %v64 = vsub.f32 %v61, %v63
    %65 = vset.pattern.permute.xlu0 2
    %66 = vperm.xlu0 %65, %v48
    %v67 = vpop.permute.xlu0 %66
    %v69 = vperm.slane %v51, 0
    %v70 = vsub.f32 %v67, %v69
    %v71 = vmul.f32 %v58, %v58
    %v72 = vmul.f32 %v64, %v64
    %v73 = vadd.f32 %v71, %v72
    %v74 = vmul.f32 %v70, %v70
    %v75 = vadd.f32 %v73, %v74
    %v76 = vadd.f32 %v75, 1e-12
    %v77 = vrsqrt.pop %v76
    %v78 = vmul.f32 %v77, %v76
    %v79 = vmul.f32 %v78, %v77
    %v80 = vmul.f32 0.5, %v79
    %v81 = vsub.f32 1.5, %v80
    %v82 = vmul.f32 %v77, %v81
    %v83 = vmul.f32 %v76, %v82
    %vm84 = vcmp.eq.f32.partialorder %v76, inf
    %v85 = vsel %vm84, %v76, %v83
    %vm86 = vcmp.eq.f32.partialorder %v76, 0.0
    %v87 = vand.u32 %v76, 2147483648
    %v88 = vsel %vm86, %v87, %v85
    %v89 = vlaneseq
    %v90 = vshrl.u32 %v89, 7
    %v91 = vlaneseq
    %v92 = vand.u32 %v91, 127
    %vm93 = vcmp.ne.s32.totalorder %v90, %v92
    %v94 = vsel %vm93, 1, 0
    %v95 = vcvt.s32.f32 %v94
    %v96 = vld [vmem:[%s4] sm:$0xff]
    %vm97 = vcmask 261120
    %v99 = vsel %vm97, %v96, 0
    %101 = vmatpush.xpose.msra.mxu0 0.0
    %102 = vmatpush.xpose.msra.mxu0 0.0
    %103 = vmatpush.xpose.msra.mxu0 0.0
    %104 = vmatpush.xpose.msra.mxu0 0.0
    %105 = vmatpush.xpose.msra.mxu0 0.0
    %106 = vmatpush.xpose.msra.mxu0 0.0
    %107 = vmatpush.xpose.msra.mxu0 0.0
    %108 = vmatpush.xpose.msra.mxu0 0.0
    %109 = vmatpush.xpose.msra.mxu0 0.0
    %110 = vmatpush.xpose.msra.mxu0 0.0
    %111 = vmatpush.xpose.msra.mxu0 0.0
    %112 = vmatpush.xpose.msra.mxu0 0.0
    %113 = vmatpush.xpose.msra.mxu0 0.0
    %114 = vmatpush.xpose.msra.mxu0 0.0
    %115 = vmatpush.xpose.msra.mxu0 0.0
    %116 = vmatpush.xpose.msra.mxu0 %v99
    %117 = vmatmul.f32.gmra.mxu0 %v99
    %v118 = vpop.f32.mrf.mxu0
    %v119 = vadd.f32 0.0, %v118
    %120 = vdwg.mxu0
    %s121 = sld [smem:[#allocation2]]
    %s122 = sld [smem:[#allocation5]]
    %v123 = vstv %s121
    %v124 = vsub.f32 %v88, %v123
    %v125 = vmul.f32 %v124, %v124
    %v126 = vmul.f32 %v125, -4.0
    %v127 = vmul.f32 %v126, 1.442695
    %v128 = vpow.pop %v127
    %v129 = vstv %s122
    %v130 = vmul.f32 %v129, %v128
    %v131 = vadd.f32 %v130, 0.0
    %s132 = smul.f32 %s122, -8.0
    %v133 = vstv %s132
    %v134 = vmul.f32 %v133, %v124
    %v135 = vmul.f32 %v134, %v128
    %v136 = vadd.f32 %v135, 0.0
    %s137 = sld [smem:[#allocation2 + $0x1]]
    %s138 = sld [smem:[#allocation5 + $0x1]]
    %v139 = vstv %s137
    %v140 = vsub.f32 %v88, %v139
    %v141 = vmul.f32 %v140, %v140
    %v142 = vmul.f32 %v141, -4.0
    %v143 = vmul.f32 %v142, 1.442695
    %v144 = vpow.pop %v143
    %v145 = vstv %s138
    %v146 = vmul.f32 %v145, %v144
    %v147 = vadd.f32 %v131, %v146
    %s148 = smul.f32 %s138, -8.0
    %v149 = vstv %s148
    %v150 = vmul.f32 %v149, %v140
    %v151 = vmul.f32 %v150, %v144
    %v152 = vadd.f32 %v136, %v151
    %s153 = sld [smem:[#allocation2 + $0x2]]
    %s154 = sld [smem:[#allocation5 + $0x2]]
    %v155 = vstv %s153
    %v156 = vsub.f32 %v88, %v155
    %v157 = vmul.f32 %v156, %v156
    %v158 = vmul.f32 %v157, -4.0
    %v159 = vmul.f32 %v158, 1.442695
    %v160 = vpow.pop %v159
    %v161 = vstv %s154
    %v162 = vmul.f32 %v161, %v160
    %v163 = vadd.f32 %v147, %v162
    %s164 = smul.f32 %s154, -8.0
    %v165 = vstv %s164
    %v166 = vmul.f32 %v165, %v156
    %v167 = vmul.f32 %v166, %v160
    %v168 = vadd.f32 %v152, %v167
    %s169 = sld [smem:[#allocation2 + $0x3]]
    %s170 = sld [smem:[#allocation5 + $0x3]]
    %v171 = vstv %s169
    %v172 = vsub.f32 %v88, %v171
    %v173 = vmul.f32 %v172, %v172
    %v174 = vmul.f32 %v173, -4.0
    %v175 = vmul.f32 %v174, 1.442695
    %v176 = vpow.pop %v175
    %v177 = vstv %s170
    %v178 = vmul.f32 %v177, %v176
    %v179 = vadd.f32 %v163, %v178
    %s180 = smul.f32 %s170, -8.0
    %v181 = vstv %s180
    %v182 = vmul.f32 %v181, %v172
    %v183 = vmul.f32 %v182, %v176
    %v184 = vadd.f32 %v168, %v183
    %s185 = sld [smem:[#allocation2 + $0x4]]
    %s186 = sld [smem:[#allocation5 + $0x4]]
    %v187 = vstv %s185
    %v188 = vsub.f32 %v88, %v187
    %v189 = vmul.f32 %v188, %v188
    %v190 = vmul.f32 %v189, -4.0
    %v191 = vmul.f32 %v190, 1.442695
    %v192 = vpow.pop %v191
    %v193 = vstv %s186
    %v194 = vmul.f32 %v193, %v192
    %v195 = vadd.f32 %v179, %v194
    %s196 = smul.f32 %s186, -8.0
    %v197 = vstv %s196
    %v198 = vmul.f32 %v197, %v188
    %v199 = vmul.f32 %v198, %v192
    %v200 = vadd.f32 %v184, %v199
    %s201 = sld [smem:[#allocation2 + $0x5]]
    %s202 = sld [smem:[#allocation5 + $0x5]]
    %v203 = vstv %s201
    %v204 = vsub.f32 %v88, %v203
    %v205 = vmul.f32 %v204, %v204
    %v206 = vmul.f32 %v205, -4.0
    %v207 = vmul.f32 %v206, 1.442695
    %v208 = vpow.pop %v207
    %v209 = vstv %s202
    %v210 = vmul.f32 %v209, %v208
    %v211 = vadd.f32 %v195, %v210
    %s212 = smul.f32 %s202, -8.0
    %v213 = vstv %s212
    %v214 = vmul.f32 %v213, %v204
    %v215 = vmul.f32 %v214, %v208
    %v216 = vadd.f32 %v200, %v215
    %s217 = sld [smem:[#allocation2 + $0x6]]
    %s218 = sld [smem:[#allocation5 + $0x6]]
    %v219 = vstv %s217
    %v220 = vsub.f32 %v88, %v219
    %v221 = vmul.f32 %v220, %v220
    %v222 = vmul.f32 %v221, -4.0
    %v223 = vmul.f32 %v222, 1.442695
    %v224 = vpow.pop %v223
    %v225 = vstv %s218
    %v226 = vmul.f32 %v225, %v224
    %v227 = vadd.f32 %v211, %v226
    %s228 = smul.f32 %s218, -8.0
    %v229 = vstv %s228
    %v230 = vmul.f32 %v229, %v220
    %v231 = vmul.f32 %v230, %v224
    %v232 = vadd.f32 %v216, %v231
    %s233 = sld [smem:[#allocation2 + $0x7]]
    %s234 = sld [smem:[#allocation5 + $0x7]]
    %v235 = vstv %s233
    %v236 = vsub.f32 %v88, %v235
    %v237 = vmul.f32 %v236, %v236
    %v238 = vmul.f32 %v237, -4.0
    %v239 = vmul.f32 %v238, 1.442695
    %v240 = vpow.pop %v239
    %v241 = vstv %s234
    %v242 = vmul.f32 %v241, %v240
    %v243 = vadd.f32 %v227, %v242
    %s244 = smul.f32 %s234, -8.0
    %v245 = vstv %s244
    %v246 = vmul.f32 %v245, %v236
    %v247 = vmul.f32 %v246, %v240
    %v248 = vadd.f32 %v232, %v247
    %s249 = sld [smem:[#allocation2 + $0x8]]
    %s250 = sld [smem:[#allocation5 + $0x8]]
    %v251 = vstv %s249
    %v252 = vsub.f32 %v88, %v251
    %v253 = vmul.f32 %v252, %v252
    %v254 = vmul.f32 %v253, -4.0
    %v255 = vmul.f32 %v254, 1.442695
    %v256 = vpow.pop %v255
    %v257 = vstv %s250
    %v258 = vmul.f32 %v257, %v256
    %v259 = vadd.f32 %v243, %v258
    %s260 = smul.f32 %s250, -8.0
    %v261 = vstv %s260
    %v262 = vmul.f32 %v261, %v252
    %v263 = vmul.f32 %v262, %v256
    %v264 = vadd.f32 %v248, %v263
    %s265 = sld [smem:[#allocation2 + $0x9]]
    %s266 = sld [smem:[#allocation5 + $0x9]]
    %v267 = vstv %s265
    %v268 = vsub.f32 %v88, %v267
    %v269 = vmul.f32 %v268, %v268
    %v270 = vmul.f32 %v269, -4.0
    %v271 = vmul.f32 %v270, 1.442695
    %v272 = vpow.pop %v271
    %v273 = vstv %s266
    %v274 = vmul.f32 %v273, %v272
    %v275 = vadd.f32 %v259, %v274
    %s276 = smul.f32 %s266, -8.0
    %v277 = vstv %s276
    %v278 = vmul.f32 %v277, %v268
    %v279 = vmul.f32 %v278, %v272
    %v280 = vadd.f32 %v264, %v279
    %s281 = sld [smem:[#allocation2 + $0xa]]
    %s282 = sld [smem:[#allocation5 + $0xa]]
    %v283 = vstv %s281
    %v284 = vsub.f32 %v88, %v283
    %v285 = vmul.f32 %v284, %v284
    %v286 = vmul.f32 %v285, -4.0
    %v287 = vmul.f32 %v286, 1.442695
    %v288 = vpow.pop %v287
    %v289 = vstv %s282
    %v290 = vmul.f32 %v289, %v288
    %v291 = vadd.f32 %v275, %v290
    %s292 = smul.f32 %s282, -8.0
    %v293 = vstv %s292
    %v294 = vmul.f32 %v293, %v284
    %v295 = vmul.f32 %v294, %v288
    %v296 = vadd.f32 %v280, %v295
    %s297 = sld [smem:[#allocation2 + $0xb]]
    %s298 = sld [smem:[#allocation5 + $0xb]]
    %v299 = vstv %s297
    %v300 = vsub.f32 %v88, %v299
    %v301 = vmul.f32 %v300, %v300
    %v302 = vmul.f32 %v301, -4.0
    %v303 = vmul.f32 %v302, 1.442695
    %v304 = vpow.pop %v303
    %v305 = vstv %s298
    %v306 = vmul.f32 %v305, %v304
    %v307 = vadd.f32 %v291, %v306
    %s308 = smul.f32 %s298, -8.0
    %v309 = vstv %s308
    %v310 = vmul.f32 %v309, %v300
    %v311 = vmul.f32 %v310, %v304
    %v312 = vadd.f32 %v296, %v311
    %s313 = sld [smem:[#allocation2 + $0xc]]
    %s314 = sld [smem:[#allocation5 + $0xc]]
    %v315 = vstv %s313
    %v316 = vsub.f32 %v88, %v315
    %v317 = vmul.f32 %v316, %v316
    %v318 = vmul.f32 %v317, -4.0
    %v319 = vmul.f32 %v318, 1.442695
    %v320 = vpow.pop %v319
    %v321 = vstv %s314
    %v322 = vmul.f32 %v321, %v320
    %v323 = vadd.f32 %v307, %v322
    %s324 = smul.f32 %s314, -8.0
    %v325 = vstv %s324
    %v326 = vmul.f32 %v325, %v316
    %v327 = vmul.f32 %v326, %v320
    %v328 = vadd.f32 %v312, %v327
    %s329 = sld [smem:[#allocation2 + $0xd]]
    %s330 = sld [smem:[#allocation5 + $0xd]]
    %v331 = vstv %s329
    %v332 = vsub.f32 %v88, %v331
    %v333 = vmul.f32 %v332, %v332
    %v334 = vmul.f32 %v333, -4.0
    %v335 = vmul.f32 %v334, 1.442695
    %v336 = vpow.pop %v335
    %v337 = vstv %s330
    %v338 = vmul.f32 %v337, %v336
    %v339 = vadd.f32 %v323, %v338
    %s340 = smul.f32 %s330, -8.0
    %v341 = vstv %s340
    %v342 = vmul.f32 %v341, %v332
    %v343 = vmul.f32 %v342, %v336
    %v344 = vadd.f32 %v328, %v343
    %s345 = sld [smem:[#allocation2 + $0xe]]
    %s346 = sld [smem:[#allocation5 + $0xe]]
    %v347 = vstv %s345
    %v348 = vsub.f32 %v88, %v347
    %v349 = vmul.f32 %v348, %v348
    %v350 = vmul.f32 %v349, -4.0
    %v351 = vmul.f32 %v350, 1.442695
    %v352 = vpow.pop %v351
    %v353 = vstv %s346
    %v354 = vmul.f32 %v353, %v352
    %v355 = vadd.f32 %v339, %v354
    %s356 = smul.f32 %s346, -8.0
    %v357 = vstv %s356
    %v358 = vmul.f32 %v357, %v348
    %v359 = vmul.f32 %v358, %v352
    %v360 = vadd.f32 %v344, %v359
    %s361 = sld [smem:[#allocation2 + $0xf]]
    %s362 = sld [smem:[#allocation5 + $0xf]]
    %v363 = vstv %s361
    %v364 = vsub.f32 %v88, %v363
    %v365 = vmul.f32 %v364, %v364
    %v366 = vmul.f32 %v365, -4.0
    %v367 = vmul.f32 %v366, 1.442695
    %v368 = vpow.pop %v367
    %v369 = vstv %s362
    %v370 = vmul.f32 %v369, %v368
    %v371 = vadd.f32 %v355, %v370
    %s372 = smul.f32 %s362, -8.0
    %v373 = vstv %s372
    %v374 = vmul.f32 %v373, %v364
    %v375 = vmul.f32 %v374, %v368
    %v376 = vadd.f32 %v360, %v375
    %v377 = vmul.f32 %v95, %v119
    %v378 = vmul.f32 %v377, %v371
    %vm379 = vcmask 64512
    %v380 = vsel %vm379, %v378, 0.0
    %381 = vadd.xlane.f32.xlu0 %v380
    %v382 = vpop.xlane.xlu0 %381
    %v383 = vrot.slane %v382, 4
    %v384 = vadd.f32 %v382, %v383
    %v385 = vrot.slane %v384, 2
    %v386 = vadd.f32 %v384, %v385
    %v387 = vrot.slane %v386, 1
    %v388 = vadd.f32 %v386, %v387
    %s389 = vtos %v388
    %s390 = smul.f32 %s389, 0.5
    %s391 = scalar_lea.smem [#allocation7], 0
    %392 = sst [smem:[%s391]] %s390
    %v393 = vmul.f32 %v377, %v376
    %v394 = vrcp.pop %v88
    %v395 = vmul.f32 %v88, %v394
    %v396 = vsub.f32 1.0, %v395
    %v397 = vmul.f32 %v394, %v396
    %v398 = vadd.f32 %v394, %v397
    %vm399 = vweird.f32 %v88
    %vm400 = vweird.f32 %v394
    %vm401 = vmor %vm399, %vm400
    %v402 = vsel %vm401, %v394, %v398
    %v403 = vand.u32 2147483647, %v88
    %vm404 = vcmp.eq.f32.partialorder %v403, 8.507059e+37
    %v405 = vand.u32 %v88, 2147483648
    %v406 = vor.u32 1.1754944e-38, %v405
    %v407 = vsel %vm404, %v406, %v402
    %v408 = vmul.f32 %v393, %v407
    %v409 = vmul.f32 %v408, %v58
    %v410 = vsel %vm379, %v409, 0.0
    %411 = vadd.xlane.f32.xlu0 %v410
    %v412 = vpop.xlane.xlu0 %411
    %v413 = vmul.f32 %v408, %v64
    %v414 = vsel %vm379, %v413, 0.0
    %415 = vadd.xlane.f32.xlu0 %v414
    %v416 = vpop.xlane.xlu0 %415
    %v417 = vmul.f32 %v408, %v70
    %v418 = vsel %vm379, %v417, 0.0
    %419 = vadd.xlane.f32.xlu0 %v418
    %v420 = vpop.xlane.xlu0 %419
    %vm421 = vcmp.eq.s32.totalorder %v92, 0
    %v422 = vsub.f32 0.0, %v412
    %v423 = vsel %vm421, %v422, 0.0
    %vm424 = vcmp.eq.s32.totalorder %v92, 1
    %v425 = vsub.f32 0.0, %v416
    %v426 = vsel %vm424, %v425, %v423
    %vm427 = vcmp.eq.s32.totalorder %v92, 2
    %v428 = vsub.f32 0.0, %v420
    %v429 = vsel %vm427, %v428, %v426
    %430 = vst [vmem:[%s6] sm:$0xff] %v429
    // Predicated region
    $region30: #{_batched_energy_forces.1} parent=1 // pred_check
      _
    $region31: #{_batched_energy_forces.1} parent=1 // pred_check_branch
      %432 = sbr.rel (0) target = $region33
    $region32: #{_batched_energy_forces.1} parent=1 // pred_region
      %434 = vsyncadd [#allocation3], 0
      %s436 = sshll.u32 %s5, 4
      %s437 = int_to_ptr.hbm [resolvable:$true] %s436
      %439 = dma.smem_to_hbm [#allocation7], 16, %s437, [#allocation3]
    $region33: #{_batched_energy_forces.1} parent=1 // pred_fallthru
      _
    // Predicated region
    $region34: #{_batched_energy_forces.1} parent=1 // pred_check
      _
    $region35: #{_batched_energy_forces.1} parent=1 // pred_check_branch
      %441 = sbr.rel (0) target = $region37
    $region36: #{_batched_energy_forces.1} parent=1 // pred_region
      _
    $region37: #{_batched_energy_forces.1} parent=1 // pred_fallthru
      _
    // Predicated region
    $region38: #{_batched_energy_forces.1} parent=1 // pred_check
      _
    $region39: #{_batched_energy_forces.1} parent=1 // pred_check_branch
      %443 = sbr.rel (0) target = $region41
    $region40: #{_batched_energy_forces.1} parent=1 // pred_region
      %445 = dma.done [#allocation3], 16
    $region41: #{_batched_energy_forces.1} parent=1 // pred_fallthru
      _
    // Predicated region
    $region42: #{_batched_energy_forces.1} parent=1 // pred_check
      _
    $region43: #{_batched_energy_forces.1} parent=1 // pred_check_branch
      %447 = sbr.rel (0) target = $region45
    $region44: #{_batched_energy_forces.1} parent=1 // pred_region
      _
    $region45: #{_batched_energy_forces.1} parent=1 // pred_fallthru
      _
    %448 = sfence
    %449 = vsyncpa [#allocation3], 1
    %450 = vsyncpa [#allocation4], 1
    %451 = vsyncpa [#allocation6], 1

</llo_original>
